<compile_context>
chip_gen: v5e
topology: v5e:2x2
jax: 0.10.0
libtpu: 0.0.40
codegen_flags: <defaults>
</compile_context>

<pallas_src>
import math
import functools

import jax
import jax.numpy as jnp
from jax.experimental import pallas as pl
from jax.experimental.pallas import tpu as pltpu


def _gelu(x):
    # tanh-approximate GELU, computed in f32 (tanh goes to the EUP slot).
    c = math.sqrt(2.0 / math.pi)
    return 0.5 * x * (1.0 + jnp.tanh(c * (x + 0.044715 * (x * x * x))))


def _gluer_kernel(compute_dtype,
                  x_ref, pos_ref,
                  w1_ref, b1_ref, w2_ref, b2_ref, w3_ref, b3_ref,
                  out_ref):
    """One grid step == one (batch-tile, seq-tile) block.

    x_ref   : (TB, TS, E_enc)        activations (f32)
    pos_ref : (1,  TS, D)            positional encoding (f32)
    w*_ref  : (in, out)              pre-transposed weights (compute dtype)
    b*_ref  : (1, out)               biases (f32)
    out_ref : (TB, TS, D)
    """
    tb, ts, e_in = x_ref.shape
    d_out = out_ref.shape[-1]

    # Fold (TB, TS) -> rows. TS is sublane-aligned (multiple of 8), so this is a
    # layout-preserving merge of leading dims (no lane movement).
    x = x_ref[...].reshape(tb * ts, e_in).astype(compute_dtype)

    # MXU matmuls: compute-dtype (bf16) operands, f32 accumulation.
    h = jnp.dot(x, w1_ref[...], preferred_element_type=jnp.float32) + b1_ref[...]
    h = _gelu(h)                                                        # f32

    h = jnp.dot(h.astype(compute_dtype), w2_ref[...],
                preferred_element_type=jnp.float32) + b2_ref[...]
    h = _gelu(h)                                                        # f32

    y = jnp.dot(h.astype(compute_dtype), w3_ref[...],
                preferred_element_type=jnp.float32) + b3_ref[...]

    y = y.reshape(tb, ts, d_out) + pos_ref[...]       # pos broadcasts over TB
    out_ref[...] = y.astype(out_ref.dtype)


def p2_encoder_gluer(x, params, *, use_bf16=True, rows_per_block=512):
    """x: (B, S, E_enc) -> (B, S, D)."""
    B, S, E_in = x.shape
    D = params["w1_t"].shape[1]
    H = params["w2_t"].shape[1]          # = 4 * D
    assert params["pos"].shape == (1, S, D)

    compute_dtype = jnp.bfloat16 if use_bf16 else x.dtype

    # Weights in the MXU compute dtype (one-time cast, also halves weight DMA);
    # biases and the positional encoding stay f32.
    w1 = params["w1_t"].astype(compute_dtype)
    w2 = params["w2_t"].astype(compute_dtype)
    w3 = params["w3_t"].astype(compute_dtype)
    b1, b2, b3 = params["b1"], params["b2"], params["b3"]
    pos = params["pos"]

    # Tiling: full sequence per block (keeps the pos-enc add trivial) and fold as
    # many batch elements as needed to reach ~rows_per_block rows per grid step
    # (amortizes the ~0.35us per-step overhead, keeps sublanes dense).
    TS = S
    TB = max(1, min(B, rows_per_block // max(TS, 1)))
    grid = (pl.cdiv(B, TB), pl.cdiv(S, TS))

    const2d = lambda b, s: (0, 0)
    kernel = functools.partial(_gluer_kernel, compute_dtype)

    return pl.pallas_call(
        kernel,
        out_shape=jax.ShapeDtypeStruct((B, S, D), x.dtype),
        grid_spec=pltpu.PrefetchScalarGridSpec(
            num_scalar_prefetch=0,
            grid=grid,
            in_specs=[
                pl.BlockSpec((TB, TS, E_in), lambda b, s: (b, s, 0)),   # x
                pl.BlockSpec((1, TS, D),     lambda b, s: (0, s, 0)),   # pos
                # Grid-invariant weight/bias blocks: constant index_map -> the
                # pipeline DMAs them once and never re-fetches across steps.
                pl.BlockSpec((E_in, D), const2d),                       # w1_t
                pl.BlockSpec((1, D),    const2d),                       # b1
                pl.BlockSpec((D, H),    const2d),                       # w2_t
                pl.BlockSpec((1, H),    const2d),                       # b2
                pl.BlockSpec((H, D),    const2d),                       # w3_t
                pl.BlockSpec((1, D),    const2d),                       # b3
            ],
            out_specs=pl.BlockSpec((TB, TS, D), lambda b, s: (b, s, 0)),
        ),
        compiler_params=pltpu.CompilerParams(
            dimension_semantics=("parallel", "parallel"),
            vmem_limit_bytes=64 * 1024 * 1024,
        ),
    )(x, pos, w1, b1, w2, b2, w3, b3)


def _reference(x, params):
    """Pure-JAX reference matching the PyTorch module in eval mode (f32)."""
    hp = jax.lax.Precision.HIGHEST
    h = _gelu(jnp.dot(x, params["w1_t"], precision=hp) + params["b1"])
    h = _gelu(jnp.dot(h, params["w2_t"], precision=hp) + params["b2"])
    y = jnp.dot(h, params["w3_t"], precision=hp) + params["b3"]
    return y + params["pos"]


def make_params(key, encoder_token_dim, encoder_seq_length, decoder_token_dim):
    """Deterministic synthetic parameters mirroring the nn.Module's shapes.

    PyTorch holds Linear weights as (out, in); we store the transposes (in, out)
    so kernels do x @ W_t + b.  positional_encoding is (1, S, D).
    """
    E, S, D = encoder_token_dim, encoder_seq_length, decoder_token_dim
    H = 4 * D
    ks = jax.random.split(key, 7)

    def lin_t(kw, fan_in, fan_out):
        return jax.random.normal(kw, (fan_in, fan_out), jnp.float32) / math.sqrt(fan_in)

    return {
        "w1_t": lin_t(ks[0], E, D),
        "b1": jax.random.normal(ks[1], (1, D), jnp.float32) * 0.02,
        "w2_t": lin_t(ks[2], D, H),
        "b2": jax.random.normal(ks[3], (1, H), jnp.float32) * 0.02,
        "w3_t": lin_t(ks[4], H, D),
        "b3": jax.random.normal(ks[5], (1, D), jnp.float32) * 0.02,
        "pos": jax.random.normal(ks[6], (1, S, D), jnp.float32),
    }


if __name__ == "__main__":
    # batch=2, encoder_seq_length=16, encoder_token_dim=48, decoder_token_dim=32
    B, S, E_in, D = 2, 16, 48, 32

    key = jax.random.PRNGKey(0)
    k_x, k_p = jax.random.split(key)
    x = jax.random.normal(k_x, (B, S, E_in), jnp.float32)
    params = make_params(k_p, E_in, S, D)

    ref = _reference(x, params)

    # f32 path: tight check.
    out_f32 = jax.block_until_ready(p2_encoder_gluer(x, params, use_bf16=False))
    assert out_f32.shape == (B, S, D)
    assert jnp.allclose(out_f32, ref, rtol=5e-3, atol=5e-3), "f32 kernel mismatch vs reference"

    # bf16 MXU fast path (f32 accumulation): looser tolerance.
    out_bf16 = jax.block_until_ready(p2_encoder_gluer(x, params, use_bf16=True))
    assert out_bf16.shape == (B, S, D)
    assert jnp.allclose(out_bf16, ref, rtol=3e-2, atol=3e-2), "bf16 kernel mismatch vs reference"

    print("KERNEL_OK")
</pallas_src>

<mosaic_0001>
module attributes {stable_mosaic.version = 11 : i64} {
  func.func @_gluer_kernel(%arg0: i32, %arg1: i32, %arg2: memref<2x16x48xf32, #tpu.memory_space<vmem>>, %arg3: memref<1x16x32xf32, #tpu.memory_space<vmem>>, %arg4: memref<48x32xf32, #tpu.memory_space<vmem>>, %arg5: memref<1x32xf32, #tpu.memory_space<vmem>>, %arg6: memref<32x128xf32, #tpu.memory_space<vmem>>, %arg7: memref<1x128xf32, #tpu.memory_space<vmem>>, %arg8: memref<128x32xf32, #tpu.memory_space<vmem>>, %arg9: memref<1x32xf32, #tpu.memory_space<vmem>>, %arg10: memref<2x16x32xf32, #tpu.memory_space<vmem>>) attributes {dimension_semantics = [#tpu.dimension_semantics<parallel>, #tpu.dimension_semantics<parallel>], iteration_bounds = array<i64: 1, 1>, scalar_prefetch = 0 : i64, scratch_operands = 0 : i64, tpu.core_type = #tpu.core_type<tc>, window_params = [{transform_indices = @transform_0, window_bounds = array<i64: 2, 16, 48>}, {transform_indices = @transform_1, window_bounds = array<i64: 1, 16, 32>}, {pipeline_mode = #tpu.pipeline_mode<synchronous>, transform_indices = @transform_2, window_bounds = array<i64: 48, 32>}, {pipeline_mode = #tpu.pipeline_mode<synchronous>, transform_indices = @transform_3, window_bounds = array<i64: 1, 32>}, {pipeline_mode = #tpu.pipeline_mode<synchronous>, transform_indices = @transform_4, window_bounds = array<i64: 32, 128>}, {pipeline_mode = #tpu.pipeline_mode<synchronous>, transform_indices = @transform_5, window_bounds = array<i64: 1, 128>}, {pipeline_mode = #tpu.pipeline_mode<synchronous>, transform_indices = @transform_6, window_bounds = array<i64: 128, 32>}, {pipeline_mode = #tpu.pipeline_mode<synchronous>, transform_indices = @transform_7, window_bounds = array<i64: 1, 32>}, {transform_indices = @transform_8, window_bounds = array<i64: 2, 16, 32>}]} {
    %c0 = arith.constant 0 : index
    %c0_0 = arith.constant 0 : index
    %c0_1 = arith.constant 0 : index
    %0 = vector.load %arg2[%c0, %c0_0, %c0_1] : memref<2x16x48xf32, #tpu.memory_space<vmem>>, vector<2x16x48xf32>
    %1 = vector.shape_cast %0 : vector<2x16x48xf32> to vector<32x48xf32>
    %c0_2 = arith.constant 0 : index
    %c0_3 = arith.constant 0 : index
    %2 = vector.load %arg4[%c0_2, %c0_3] : memref<48x32xf32, #tpu.memory_space<vmem>>, vector<48x32xf32>
    %cst = arith.constant dense<0.000000e+00> : vector<32x32xf32>
    %3 = tpu.matmul %1, %2, %cst {dimension_numbers = #tpu.dot_dimension_numbers<[1], [0], [0], [1], [0, 0, 1, 1], [], []>} : vector<32x48xf32>, vector<48x32xf32>, vector<32x32xf32> -> vector<32x32xf32>
    %c0_4 = arith.constant 0 : index
    %c0_5 = arith.constant 0 : index
    %4 = vector.load %arg5[%c0_4, %c0_5] : memref<1x32xf32, #tpu.memory_space<vmem>>, vector<1x32xf32>
    %5 = vector.broadcast %4 : vector<1x32xf32> to vector<32x32xf32>
    %6 = arith.addf %3, %5 : vector<32x32xf32>
    %cst_6 = arith.constant 5.000000e-01 : f32
    %7 = vector.broadcast %cst_6 : f32 to vector<32x32xf32>
    %8 = arith.mulf %7, %6 : vector<32x32xf32>
    %9 = arith.mulf %6, %6 : vector<32x32xf32>
    %10 = arith.mulf %9, %6 : vector<32x32xf32>
    %cst_7 = arith.constant 4.471500e-02 : f32
    %11 = vector.broadcast %cst_7 : f32 to vector<32x32xf32>
    %12 = arith.mulf %11, %10 : vector<32x32xf32>
    %13 = arith.addf %6, %12 : vector<32x32xf32>
    %cst_8 = arith.constant 0.797884583 : f32
    %14 = vector.broadcast %cst_8 : f32 to vector<32x32xf32>
    %15 = arith.mulf %14, %13 : vector<32x32xf32>
    %16 = math.tanh %15 : vector<32x32xf32>
    %cst_9 = arith.constant 1.000000e+00 : f32
    %17 = vector.broadcast %cst_9 : f32 to vector<32x32xf32>
    %18 = arith.addf %17, %16 : vector<32x32xf32>
    %19 = arith.mulf %8, %18 : vector<32x32xf32>
    %c0_10 = arith.constant 0 : index
    %c0_11 = arith.constant 0 : index
    %20 = vector.load %arg6[%c0_10, %c0_11] : memref<32x128xf32, #tpu.memory_space<vmem>>, vector<32x128xf32>
    %cst_12 = arith.constant dense<0.000000e+00> : vector<32x128xf32>
    %21 = tpu.matmul %19, %20, %cst_12 {dimension_numbers = #tpu.dot_dimension_numbers<[1], [0], [0], [1], [0, 0, 1, 1], [], []>} : vector<32x32xf32>, vector<32x128xf32>, vector<32x128xf32> -> vector<32x128xf32>
    %c0_13 = arith.constant 0 : index
    %c0_14 = arith.constant 0 : index
    %22 = vector.load %arg7[%c0_13, %c0_14] : memref<1x128xf32, #tpu.memory_space<vmem>>, vector<1x128xf32>
    %23 = vector.broadcast %22 : vector<1x128xf32> to vector<32x128xf32>
    %24 = arith.addf %21, %23 : vector<32x128xf32>
    %cst_15 = arith.constant 5.000000e-01 : f32
    %25 = vector.broadcast %cst_15 : f32 to vector<32x128xf32>
    %26 = arith.mulf %25, %24 : vector<32x128xf32>
    %27 = arith.mulf %24, %24 : vector<32x128xf32>
    %28 = arith.mulf %27, %24 : vector<32x128xf32>
    %cst_16 = arith.constant 4.471500e-02 : f32
    %29 = vector.broadcast %cst_16 : f32 to vector<32x128xf32>
    %30 = arith.mulf %29, %28 : vector<32x128xf32>
    %31 = arith.addf %24, %30 : vector<32x128xf32>
    %cst_17 = arith.constant 0.797884583 : f32
    %32 = vector.broadcast %cst_17 : f32 to vector<32x128xf32>
    %33 = arith.mulf %32, %31 : vector<32x128xf32>
    %34 = math.tanh %33 : vector<32x128xf32>
    %cst_18 = arith.constant 1.000000e+00 : f32
    %35 = vector.broadcast %cst_18 : f32 to vector<32x128xf32>
    %36 = arith.addf %35, %34 : vector<32x128xf32>
    %37 = arith.mulf %26, %36 : vector<32x128xf32>
    %c0_19 = arith.constant 0 : index
    %c0_20 = arith.constant 0 : index
    %38 = vector.load %arg8[%c0_19, %c0_20] : memref<128x32xf32, #tpu.memory_space<vmem>>, vector<128x32xf32>
    %cst_21 = arith.constant dense<0.000000e+00> : vector<32x32xf32>
    %39 = tpu.matmul %37, %38, %cst_21 {dimension_numbers = #tpu.dot_dimension_numbers<[1], [0], [0], [1], [0, 0, 1, 1], [], []>} : vector<32x128xf32>, vector<128x32xf32>, vector<32x32xf32> -> vector<32x32xf32>
    %c0_22 = arith.constant 0 : index
    %c0_23 = arith.constant 0 : index
    %40 = vector.load %arg9[%c0_22, %c0_23] : memref<1x32xf32, #tpu.memory_space<vmem>>, vector<1x32xf32>
    %41 = vector.broadcast %40 : vector<1x32xf32> to vector<32x32xf32>
    %42 = arith.addf %39, %41 : vector<32x32xf32>
    %43 = vector.shape_cast %42 : vector<32x32xf32> to vector<2x16x32xf32>
    %c0_24 = arith.constant 0 : index
    %c0_25 = arith.constant 0 : index
    %c0_26 = arith.constant 0 : index
    %44 = vector.load %arg3[%c0_24, %c0_25, %c0_26] : memref<1x16x32xf32, #tpu.memory_space<vmem>>, vector<1x16x32xf32>
    %45 = vector.broadcast %44 : vector<1x16x32xf32> to vector<2x16x32xf32>
    %46 = arith.addf %43, %45 : vector<2x16x32xf32>
    %c0_27 = arith.constant 0 : index
    %c0_28 = arith.constant 0 : index
    %c0_29 = arith.constant 0 : index
    %47 = vector.load %arg10[%c0_27, %c0_28, %c0_29] : memref<2x16x32xf32, #tpu.memory_space<vmem>>, vector<2x16x32xf32>
    tpu.vector_store %arg10[%c0_27, %c0_28, %c0_29], %46 {strides = array<i32>} : memref<2x16x32xf32, #tpu.memory_space<vmem>>, vector<2x16x32xf32>,
    return
  }
  func.func @transform_0(%arg0: i32, %arg1: i32) -> (i32, i32, i32) {
    %c0_i32 = arith.constant 0 : i32
    %c0_i32_0 = arith.constant 0 : i32
    return %arg0, %arg1, %c0_i32 : i32, i32, i32
  }
  func.func @transform_1(%arg0: i32, %arg1: i32) -> (i32, i32, i32) {
    %c0_i32 = arith.constant 0 : i32
    %c0_i32_0 = arith.constant 0 : i32
    %c0_i32_1 = arith.constant 0 : i32
    return %c0_i32, %arg1, %c0_i32_0 : i32, i32, i32
  }
  func.func @transform_2(%arg0: i32, %arg1: i32) -> (i32, i32) {
    %c0_i32 = arith.constant 0 : i32
    %c0_i32_0 = arith.constant 0 : i32
    %c0_i32_1 = arith.constant 0 : i32
    return %c0_i32, %c0_i32_0 : i32, i32
  }
  func.func @transform_3(%arg0: i32, %arg1: i32) -> (i32, i32) {
    %c0_i32 = arith.constant 0 : i32
    %c0_i32_0 = arith.constant 0 : i32
    %c0_i32_1 = arith.constant 0 : i32
    return %c0_i32, %c0_i32_0 : i32, i32
  }
  func.func @transform_4(%arg0: i32, %arg1: i32) -> (i32, i32) {
    %c0_i32 = arith.constant 0 : i32
    %c0_i32_0 = arith.constant 0 : i32
    %c0_i32_1 = arith.constant 0 : i32
    return %c0_i32, %c0_i32_0 : i32, i32
  }
  func.func @transform_5(%arg0: i32, %arg1: i32) -> (i32, i32) {
    %c0_i32 = arith.constant 0 : i32
    %c0_i32_0 = arith.constant 0 : i32
    %c0_i32_1 = arith.constant 0 : i32
    return %c0_i32, %c0_i32_0 : i32, i32
  }
  func.func @transform_6(%arg0: i32, %arg1: i32) -> (i32, i32) {
    %c0_i32 = arith.constant 0 : i32
    %c0_i32_0 = arith.constant 0 : i32
    %c0_i32_1 = arith.constant 0 : i32
    return %c0_i32, %c0_i32_0 : i32, i32
  }
  func.func @transform_7(%arg0: i32, %arg1: i32) -> (i32, i32) {
    %c0_i32 = arith.constant 0 : i32
    %c0_i32_0 = arith.constant 0 : i32
    %c0_i32_1 = arith.constant 0 : i32
    return %c0_i32, %c0_i32_0 : i32, i32
  }
  func.func @transform_8(%arg0: i32, %arg1: i32) -> (i32, i32, i32) {
    %c0_i32 = arith.constant 0 : i32
    %c0_i32_0 = arith.constant 0 : i32
    return %arg0, %arg1, %c0_i32 : i32, i32, i32
  }
}

</mosaic_0001>

<llo_original>
// kernel: tpu_custom_call.1
$region0: #{tpu_custom_call.1}
  #allocation0 [shape = 'u32[]', space=smem, size = 0x4, offset = 0x4, fixed_abs, tag = 'smem constant byte address 0x4 - core index']
  #allocation1 [shape = 'u32[72,128]{1,0:T(1,128)}', space=vmem, size = 0x9000, scoped, tag = 'internal scratch']
  %s0 = inlined_call_operand.vmem [shape: f32[2,16,48], index: 0, kind: input, shape index: {}]
  %s1 = inlined_call_operand.vmem [shape: f32[1,16,32], index: 1, kind: input, shape index: {}]
  %s2 = inlined_call_operand.vmem [shape: f32[48,32], index: 2, kind: input, shape index: {}]
  %s3 = inlined_call_operand.vmem [shape: f32[1,32], index: 3, kind: input, shape index: {}]
  %s4 = inlined_call_operand.vmem [shape: f32[32,128], index: 4, kind: input, shape index: {}]
  %s5 = inlined_call_operand.vmem [shape: f32[1,128], index: 5, kind: input, shape index: {}]
  %s6 = inlined_call_operand.vmem [shape: f32[128,32], index: 6, kind: input, shape index: {}]
  %s7 = inlined_call_operand.vmem [shape: f32[1,32], index: 7, kind: input, shape index: {}]
  %s8 = inlined_call_operand.hbm [shape: f32[2,16,32], index: 8, kind: output, shape index: {}]
  %s9 = sld [smem:[#allocation0]]
  $region42: #{tpu_custom_call.1} parent=0
    _
  %s11 = ssub.s32 1, %s9
  %s12 = scalar_select 0, %s11, %s9
  $region1: #{tpu_custom_call.1} parent=0
    #allocation2 [shape = 'u8[16384]{0}', space=vmem, size = 0x4000, scoped, tag = 'output window, operand 0, single buffered']
    #allocation3 [shape = 's32[1]{0}', space=sflag, size = 0x4, scoped, tag = 'scoped memory for tpu_custom_call.1']
    %13 = vsyncpa [#allocation3], 0
    // Predicated region
    $region2: #{tpu_custom_call.1} parent=1 // pred_check
      _
    $region3: #{tpu_custom_call.1} parent=1 // pred_check_branch
      %15 = sbr.rel (0) target = $region5
    $region4: #{tpu_custom_call.1} parent=1 // pred_region
      _
    $region5: #{tpu_custom_call.1} parent=1 // pred_fallthru
      _
    // Predicated region
    $region6: #{tpu_custom_call.1} parent=1 // pred_check
      _
    $region7: #{tpu_custom_call.1} parent=1 // pred_check_branch
      %17 = sbr.rel (0) target = $region9
    $region8: #{tpu_custom_call.1} parent=1 // pred_region
      _
    $region9: #{tpu_custom_call.1} parent=1 // pred_fallthru
      _
    // Predicated region
    $region10: #{tpu_custom_call.1} parent=1 // pred_check
      _
    $region11: #{tpu_custom_call.1} parent=1 // pred_check_branch
      %19 = sbr.rel (0) target = $region13
    $region12: #{tpu_custom_call.1} parent=1 // pred_region
      _
    $region13: #{tpu_custom_call.1} parent=1 // pred_fallthru
      _
    // Predicated region
    $region14: #{tpu_custom_call.1} parent=1 // pred_check
      _
    $region15: #{tpu_custom_call.1} parent=1 // pred_check_branch
      %21 = sbr.rel (0) target = $region17
    $region16: #{tpu_custom_call.1} parent=1 // pred_region
      _
    $region17: #{tpu_custom_call.1} parent=1 // pred_fallthru
      _
    // Predicated region
    $region18: #{tpu_custom_call.1} parent=1 // pred_check
      _
    $region19: #{tpu_custom_call.1} parent=1 // pred_check_branch
      %23 = sbr.rel (0) target = $region21
    $region20: #{tpu_custom_call.1} parent=1 // pred_region
      _
    $region21: #{tpu_custom_call.1} parent=1 // pred_fallthru
      _
    // Predicated region
    $region22: #{tpu_custom_call.1} parent=1 // pred_check
      _
    $region23: #{tpu_custom_call.1} parent=1 // pred_check_branch
      %25 = sbr.rel (0) target = $region25
    $region24: #{tpu_custom_call.1} parent=1 // pred_region
      _
    $region25: #{tpu_custom_call.1} parent=1 // pred_fallthru
      _
    // Predicated region
    $region26: #{tpu_custom_call.1} parent=1 // pred_check
      _
    $region27: #{tpu_custom_call.1} parent=1 // pred_check_branch
      %27 = sbr.rel (0) target = $region29
    $region28: #{tpu_custom_call.1} parent=1 // pred_region
      _
    $region29: #{tpu_custom_call.1} parent=1 // pred_fallthru
      _
    // Predicated region
    $region30: #{tpu_custom_call.1} parent=1 // pred_check
      _
    $region31: #{tpu_custom_call.1} parent=1 // pred_check_branch
      %29 = sbr.rel (0) target = $region33
    $region32: #{tpu_custom_call.1} parent=1 // pred_region
      _
    $region33: #{tpu_custom_call.1} parent=1 // pred_fallthru
      _
    %v30 = vld [vmem:[%s0] sm:$0xff]
    %v31 = vld [vmem:[%s0 + $0x8] sm:$0xff]
    %v32 = vld [vmem:[%s0 + $0x10] sm:$0xff]
    %v33 = vld [vmem:[%s0 + $0x18] sm:$0xff]
    %v34 = vld [vmem:[%s2] sm:$0xff]
    %v35 = vld [vmem:[%s2 + $0x8] sm:$0xff]
    %v36 = vld [vmem:[%s2 + $0x10] sm:$0xff]
    %v37 = vld [vmem:[%s2 + $0x18] sm:$0xff]
    %v38 = vld [vmem:[%s2 + $0x20] sm:$0xff]
    %v39 = vld [vmem:[%s2 + $0x28] sm:$0xff]
    %v40 = vld [vmem:[%s3] sm:$0x1]
    %v42 = vperm.slane %v40, 0
    %vm44 = vcmask 392192
    %v46 = vsel %vm44, %v30, 0
    %v49 = vsel %vm44, %v31, 0
    %v52 = vsel %vm44, %v32, 0
    %v55 = vsel %vm44, %v33, 0
    %57 = vmatpush.msra.mxu0 0.0
    %58 = vmatpush.msra.mxu0 0.0
    %59 = vmatpush.msra.mxu0 0.0
    %60 = vmatpush.msra.mxu0 0.0
    %61 = vmatpush.msra.mxu0 0.0
    %62 = vmatpush.msra.mxu0 0.0
    %63 = vmatpush.msra.mxu0 0.0
    %64 = vmatpush.msra.mxu0 0.0
    %65 = vmatpush.msra.mxu0 0.0
    %66 = vmatpush.msra.mxu0 0.0
    %67 = vmatpush.msra.mxu0 %v39
    %68 = vmatpush.msra.mxu0 %v38
    %69 = vmatpush.msra.mxu0 %v37
    %70 = vmatpush.msra.mxu0 %v36
    %71 = vmatpush.msra.mxu0 %v35
    %72 = vmatpush.msra.mxu0 %v34
    %73 = vmatmul.f32.gmra.mxu0 %v46
    %v74 = vpop.f32.mrf.mxu0
    %v75 = vadd.f32 %v42, %v74
    %76 = vmatmul.f32.gmra.mxu0 %v49
    %v77 = vpop.f32.mrf.mxu0
    %v78 = vadd.f32 %v42, %v77
    %79 = vmatmul.f32.gmra.mxu0 %v52
    %v80 = vpop.f32.mrf.mxu0
    %v81 = vadd.f32 %v42, %v80
    %82 = vmatmul.f32.gmra.mxu0 %v55
    %v83 = vpop.f32.mrf.mxu0
    %v84 = vadd.f32 %v42, %v83
    %85 = vdwg.mxu0
    %v86 = vmul.f32 %v75, 0.5
    %v87 = vmul.f32 %v78, 0.5
    %v88 = vmul.f32 %v81, 0.5
    %v89 = vmul.f32 %v84, 0.5
    %v90 = vmul.f32 %v75, %v75
    %v91 = vmul.f32 %v78, %v78
    %v92 = vmul.f32 %v81, %v81
    %v93 = vmul.f32 %v84, %v84
    %v94 = vmul.f32 %v90, %v75
    %v95 = vmul.f32 %v91, %v78
    %v96 = vmul.f32 %v92, %v81
    %v97 = vmul.f32 %v93, %v84
    %v98 = vmul.f32 %v94, 0.044715
    %v99 = vmul.f32 %v95, 0.044715
    %v100 = vmul.f32 %v96, 0.044715
    %v101 = vmul.f32 %v97, 0.044715
    %v102 = vadd.f32 %v75, %v98
    %v103 = vadd.f32 %v78, %v99
    %v104 = vadd.f32 %v81, %v100
    %v105 = vadd.f32 %v84, %v101
    %v106 = vmul.f32 %v102, 0.7978846
    %v107 = vmul.f32 %v103, 0.7978846
    %v108 = vmul.f32 %v104, 0.7978846
    %v109 = vmul.f32 %v105, 0.7978846
    %v110 = vtanh.pop %v106
    %v111 = vtanh.pop %v107
    %v112 = vtanh.pop %v108
    %v113 = vtanh.pop %v109
    %v114 = vadd.f32 %v110, 1.0
    %v115 = vadd.f32 %v111, 1.0
    %v116 = vadd.f32 %v112, 1.0
    %v117 = vadd.f32 %v113, 1.0
    %v118 = vmul.f32 %v86, %v114
    %v119 = vmul.f32 %v87, %v115
    %v120 = vmul.f32 %v88, %v116
    %v121 = vmul.f32 %v89, %v117
    %v122 = vld [vmem:[%s4] sm:$0xff]
    %v123 = vld [vmem:[%s4 + $0x8] sm:$0xff]
    %v124 = vld [vmem:[%s4 + $0x10] sm:$0xff]
    %v125 = vld [vmem:[%s4 + $0x18] sm:$0xff]
    %v126 = vld [vmem:[%s5] sm:$0x1]
    %v128 = vperm.slane %v126, 0
    %vm130 = vcmask 261120
    %v132 = vsel %vm130, %v118, 0
    %v135 = vsel %vm130, %v119, 0
    %v138 = vsel %vm130, %v120, 0
    %v141 = vsel %vm130, %v121, 0
    %143 = vmatpush.msra.mxu0 0.0
    %144 = vmatpush.msra.mxu0 0.0
    %145 = vmatpush.msra.mxu0 0.0
    %146 = vmatpush.msra.mxu0 0.0
    %147 = vmatpush.msra.mxu0 0.0
    %148 = vmatpush.msra.mxu0 0.0
    %149 = vmatpush.msra.mxu0 0.0
    %150 = vmatpush.msra.mxu0 0.0
    %151 = vmatpush.msra.mxu0 0.0
    %152 = vmatpush.msra.mxu0 0.0
    %153 = vmatpush.msra.mxu0 0.0
    %154 = vmatpush.msra.mxu0 0.0
    %155 = vmatpush.msra.mxu0 %v125
    %156 = vmatpush.msra.mxu0 %v124
    %157 = vmatpush.msra.mxu0 %v123
    %158 = vmatpush.msra.mxu0 %v122
    %159 = vmatmul.f32.gmra.mxu0 %v132
    %v160 = vpop.f32.mrf.mxu0
    %v161 = vadd.f32 %v128, %v160
    %162 = vmatmul.f32.gmra.mxu0 %v135
    %v163 = vpop.f32.mrf.mxu0
    %v164 = vadd.f32 %v128, %v163
    %165 = vmatmul.f32.gmra.mxu0 %v138
    %v166 = vpop.f32.mrf.mxu0
    %v167 = vadd.f32 %v128, %v166
    %168 = vmatmul.f32.gmra.mxu0 %v141
    %v169 = vpop.f32.mrf.mxu0
    %v170 = vadd.f32 %v128, %v169
    %171 = vdwg.mxu0
    %v172 = vmul.f32 %v161, 0.5
    %v173 = vmul.f32 %v164, 0.5
    %v174 = vmul.f32 %v167, 0.5
    %v175 = vmul.f32 %v170, 0.5
    %v176 = vmul.f32 %v161, %v161
    %v177 = vmul.f32 %v164, %v164
    %v178 = vmul.f32 %v167, %v167
    %v179 = vmul.f32 %v170, %v170
    %v180 = vmul.f32 %v176, %v161
    %v181 = vmul.f32 %v177, %v164
    %v182 = vmul.f32 %v178, %v167
    %v183 = vmul.f32 %v179, %v170
    %v184 = vmul.f32 %v180, 0.044715
    %v185 = vmul.f32 %v181, 0.044715
    %v186 = vmul.f32 %v182, 0.044715
    %v187 = vmul.f32 %v183, 0.044715
    %v188 = vadd.f32 %v161, %v184
    %v189 = vadd.f32 %v164, %v185
    %v190 = vadd.f32 %v167, %v186
    %v191 = vadd.f32 %v170, %v187
    %v192 = vmul.f32 %v188, 0.7978846
    %v193 = vmul.f32 %v189, 0.7978846
    %v194 = vmul.f32 %v190, 0.7978846
    %v195 = vmul.f32 %v191, 0.7978846
    %v196 = vtanh.pop %v192
    %v197 = vtanh.pop %v193
    %v198 = vtanh.pop %v194
    %v199 = vtanh.pop %v195
    %v200 = vadd.f32 %v196, 1.0
    %v201 = vadd.f32 %v197, 1.0
    %v202 = vadd.f32 %v198, 1.0
    %v203 = vadd.f32 %v199, 1.0
    %v204 = vmul.f32 %v172, %v200
    %v205 = vmul.f32 %v173, %v201
    %v206 = vmul.f32 %v174, %v202
    %v207 = vmul.f32 %v175, %v203
    %v208 = vld [vmem:[%s6] sm:$0xff]
    %v209 = vld [vmem:[%s6 + $0x8] sm:$0xff]
    %v210 = vld [vmem:[%s6 + $0x10] sm:$0xff]
    %v211 = vld [vmem:[%s6 + $0x18] sm:$0xff]
    %v212 = vld [vmem:[%s6 + $0x20] sm:$0xff]
    %v213 = vld [vmem:[%s6 + $0x28] sm:$0xff]
    %v214 = vld [vmem:[%s6 + $0x30] sm:$0xff]
    %v215 = vld [vmem:[%s6 + $0x38] sm:$0xff]
    %v216 = vld [vmem:[%s6 + $0x40] sm:$0xff]
    %v217 = vld [vmem:[%s6 + $0x48] sm:$0xff]
    %v218 = vld [vmem:[%s6 + $0x50] sm:$0xff]
    %v219 = vld [vmem:[%s6 + $0x58] sm:$0xff]
    %v220 = vld [vmem:[%s6 + $0x60] sm:$0xff]
    %v221 = vld [vmem:[%s6 + $0x68] sm:$0xff]
    %v222 = vld [vmem:[%s6 + $0x70] sm:$0xff]
    %v223 = vld [vmem:[%s6 + $0x78] sm:$0xff]
    %v224 = vld [vmem:[%s7] sm:$0x1]
    %v226 = vperm.slane %v224, 0
    %228 = vmatpush.msra.mxu0 %v223
    %229 = vmatpush.msra.mxu0 %v222
    %230 = vmatpush.msra.mxu0 %v221
    %231 = vmatpush.msra.mxu0 %v220
    %232 = vmatpush.msra.mxu0 %v219
    %233 = vmatpush.msra.mxu0 %v218
    %234 = vmatpush.msra.mxu0 %v217
    %235 = vmatpush.msra.mxu0 %v216
    %236 = vmatpush.msra.mxu0 %v215
    %237 = vmatpush.msra.mxu0 %v214
    %238 = vmatpush.msra.mxu0 %v213
    %239 = vmatpush.msra.mxu0 %v212
    %240 = vmatpush.msra.mxu0 %v211
    %241 = vmatpush.msra.mxu0 %v210
    %242 = vmatpush.msra.mxu0 %v209
    %243 = vmatpush.msra.mxu0 %v208
    %244 = vmatmul.f32.gmra.mxu0 %v204
    %v245 = vpop.f32.mrf.mxu0
    %v246 = vadd.f32 %v226, %v245
    %247 = vmatmul.f32.gmra.mxu0 %v205
    %v248 = vpop.f32.mrf.mxu0
    %v249 = vadd.f32 %v226, %v248
    %250 = vmatmul.f32.gmra.mxu0 %v206
    %v251 = vpop.f32.mrf.mxu0
    %v252 = vadd.f32 %v226, %v251
    %253 = vmatmul.f32.gmra.mxu0 %v207
    %v254 = vpop.f32.mrf.mxu0
    %v255 = vadd.f32 %v226, %v254
    %256 = vdwg.mxu0
    %v257 = vld [vmem:[%s1] sm:$0xff]
    %v258 = vld [vmem:[%s1 + $0x8] sm:$0xff]
    %v259 = vadd.f32 %v246, %v257
    %v260 = vadd.f32 %v249, %v258
    %v261 = vadd.f32 %v252, %v257
    %v262 = vadd.f32 %v255, %v258
    %263 = vst.msk [vmem:[#allocation2] sm:$0xff] %vm130, %v259
    %264 = vst.msk [vmem:[#allocation2 + $0x8] sm:$0xff] %vm130, %v260
    %265 = vst.msk [vmem:[#allocation2 + $0x10] sm:$0xff] %vm130, %v261
    %266 = vst.msk [vmem:[#allocation2 + $0x18] sm:$0xff] %vm130, %v262
    // Predicated region
    $region34: #{tpu_custom_call.1} parent=1 // pred_check
      _
    $region35: #{tpu_custom_call.1} parent=1 // pred_check_branch
      %268 = sbr.rel (0) target = $region37
    $region36: #{tpu_custom_call.1} parent=1 // pred_region
      %270 = vsyncadd [#allocation3], 0
      %s271 = sshll.u32 [#allocation2], 4
      %s272 = int_to_ptr.vmem [resolvable:$true] %s271
      %s273 = sshll.u32 %s8, 4
      %s274 = int_to_ptr.hbm [resolvable:$true] %s273
      %279 = dma.vmem_to_hbm [thread:$0]  %s272, 512, %s274, [#allocation3], 128, 128, 8
    $region37: #{tpu_custom_call.1} parent=1 // pred_fallthru
      _
    // Predicated region
    $region38: #{tpu_custom_call.1} parent=1 // pred_check
      _
    $region39: #{tpu_custom_call.1} parent=1 // pred_check_branch
      %281 = sbr.rel (0) target = $region41
    $region40: #{tpu_custom_call.1} parent=1 // pred_region
      %283 = dma.done [#allocation3], 512
    $region41: #{tpu_custom_call.1} parent=1 // pred_fallthru
      _
    %284 = vsyncpa [#allocation3], 1

</llo_original>
